<compile_context>
chip_gen: v7x
topology: tpu7x:2x2x1
jax: 0.10.0
libtpu: 0.0.40
codegen_flags: <defaults>
</compile_context>

<pallas_src>
import numpy as np
import jax
import jax.numpy as jnp
from jax import lax
from jax.experimental import pallas as pl
from jax.experimental.pallas import tpu as pltpu


def make_lru_kernel(unroll):
    def lru_kernel(x_ref, wi_ref, bi_ref, wo_ref, bo_ref, lam_ref, o_ref, y_ref):
        # x_ref:   (T, Bb, D)     bf16  time-major input block (D = true feature dim)
        # wi_ref:  (D, 2*Dp)      bf16  fused i_dense weight  [re cols | im cols] (zero padded)
        # bi_ref:  (1, 2*Dp)      f32
        # wo_ref:  (2*Dp, Dp)     bf16  fused o_dense weight with gamma folded into its rows
        # bo_ref:  (1, Dp)        f32
        # lam_ref: (2, Dp)        f32   rows = [lambda_re, lambda_im]
        # o_ref:   (T, Bb, Dp)    output dtype (= x.dtype)
        # y_ref:   (T, Bb, 2*Dp)  f32   scratch: u, then recurrence output (in place)
        T, Bb, D2p = y_ref.shape
        Dp = D2p // 2
        Din = x_ref.shape[2]

        # ---- fused i_dense: one bf16 MXU matmul (N = 2*Dp), f32 accumulate + bias.
        # Collapsing (T, Bb) -> rows is layout-free because Bb is a multiple of 16.
        x2 = x_ref[...].reshape(T * Bb, Din)
        u = jnp.dot(x2, wi_ref[...], preferred_element_type=jnp.float32) + bi_ref[...]
        y_ref[...] = u.reshape(T, Bb, D2p)

        # ---- diagonal complex recurrence h_t = lambda * h_{t-1} + u_t (all f32).
        # State is carried in registers (fori_loop carry); each step only reads
        # u_t from scratch and writes h_t back.  lambda stays (1, 1, Dp) and is
        # broadcast implicitly in the multiplies (no (Bb, Dp) live broadcast).
        lam_re = lam_ref[0:1, :].reshape(1, 1, Dp)
        lam_im = lam_ref[1:2, :].reshape(1, 1, Dp)

        def body(t, carry):
            h_re, h_im = carry
            u_re = y_ref[pl.ds(t, 1), :, 0:Dp]          # lane-aligned (Dp % 128 == 0)
            u_im = y_ref[pl.ds(t, 1), :, Dp:D2p]
            n_re = lam_re * h_re - lam_im * h_im + u_re
            n_im = lam_re * h_im + lam_im * h_re + u_im
            y_ref[pl.ds(t, 1), :, 0:Dp] = n_re
            y_ref[pl.ds(t, 1), :, Dp:D2p] = n_im
            return n_re, n_im

        lax.fori_loop(1, T, body,
                      (y_ref[pl.ds(0, 1), :, 0:Dp], y_ref[pl.ds(0, 1), :, Dp:D2p]),
                      unroll=unroll)

        # ---- fused o_dense (K = 2*Dp, gamma already folded into wo) + bias + ReLU.
        z = y_ref[...].reshape(T * Bb, D2p).astype(jnp.bfloat16)
        out = jnp.dot(z, wo_ref[...], preferred_element_type=jnp.float32) + bo_ref[...]
        o_ref[...] = jnp.maximum(out, 0.0).reshape(T, Bb, Dp).astype(o_ref.dtype)

    return lru_kernel


def _vmem_capacity_bytes():
    try:
        return int(pltpu.get_tpu_info().vmem_capacity_bytes)
    except Exception:
        return 64 * 1024 * 1024   # conservative default (v7x per-core VMEM)


def _choose_bblk(B, T, D, Dp, out_bytes, vmem_budget):
    """Batch rows per grid step (always a multiple of 16 so the f32/bf16
    sublane tiles align and the in-kernel collapse-reshapes are layout-free)."""
    rnd16 = lambda n: ((n + 15) // 16) * 16
    # Cap 1: register-carried recurrence state 2*Bblk*Dp f32 <= ~96 KiB so the
    # serial critical path never spills to VMEM.
    vreg_cap = max(16, (96 * 1024 // (8 * Dp)) // 16 * 16)
    # Cap 2: VMEM footprint — f32 scratch (single-buffered) plus double-buffered
    # bf16 input and output blocks per batch row, plus double-buffered weights.
    per_row = T * (2 * Dp * 4 + 2 * D * 2 + 2 * Dp * out_bytes)
    fixed = 2 * 2 * (D * 2 * Dp + 2 * Dp * Dp) + 64 * 1024
    vmem_cap = max(16, ((vmem_budget - fixed) // max(per_row, 1)) // 16 * 16)
    # Take the largest block the caps allow (amortizes ~0.35us/grid-step); this
    # automatically satisfies the >=256 matmul rows / >=4K recurrence elements
    # latency-hiding lower bound whenever the caps and the batch permit it.
    bblk = min(vreg_cap, vmem_cap, rnd16(B))
    if B >= 32:
        # v7x has 2 TensorCores: keep at least 2 grid steps so both get work.
        bblk = min(bblk, rnd16(-(-B // 2)))
    return max(16, bblk)


def lru_forward(x, w_in, b_in, w_out, b_out, v, theta, gamma):
    """x: (B, T, D). w_in: (D, 2D) (x @ w_in convention). b_in: (2D,).
    w_out: (2D, D). b_out: (D,). v/theta/gamma: (D,)."""
    B, T, D = x.shape
    out_dtype = x.dtype
    Dp = ((D + 127) // 128) * 128          # lane-dense hidden dim
    D2p = 2 * Dp

    vmem_cap = _vmem_capacity_bytes()
    Bblk = _choose_bblk(B, T, D, Dp, jnp.dtype(out_dtype).itemsize, (vmem_cap * 3) // 5)
    Bp = ((B + Bblk - 1) // Bblk) * Bblk

    # Unroll: full for short sequences; shrink when the register-carried state
    # is large so the unrolled body does not blow the vreg file.
    carry_vregs = (2 * Bblk * Dp) // 1024
    if T <= 64:
        unroll = True
    elif carry_vregs <= 8:
        unroll = 8
    elif carry_vregs <= 16:
        unroll = 4
    else:
        unroll = 2

    # Time-major, batch padded to a multiple of Bblk, bf16 operand for the MXU.
    xt = jnp.transpose(x, (1, 0, 2))
    if Bp != B:
        xt = jnp.pad(xt, ((0, 0), (0, Bp - B), (0, 0)))
    xt = xt.astype(jnp.bfloat16)

    f32 = jnp.float32
    w_in = w_in.astype(f32); b_in = b_in.astype(f32)
    w_out = w_out.astype(f32); b_out = b_out.astype(f32)
    v = v.astype(f32); theta = theta.astype(f32); gamma = gamma.astype(f32)
    # lambda = exp(-v + i*theta); recurrence params stay f32.
    lam_re = jnp.exp(-v) * jnp.cos(theta)
    lam_im = jnp.exp(-v) * jnp.sin(theta)

    # Fused, zero-padded i_dense weight: even w_in cols (real) -> cols [0:D),
    # odd cols (imag) -> cols [Dp:Dp+D).  Padded features get u == 0.
    wi = jnp.zeros((D, D2p), f32)
    wi = wi.at[:, 0:D].set(w_in[:, 0::2]).at[:, Dp:Dp + D].set(w_in[:, 1::2])
    bi = jnp.zeros((1, D2p), f32)
    bi = bi.at[0, 0:D].set(b_in[0::2]).at[0, Dp:Dp + D].set(b_in[1::2])
    # Fused o_dense weight with gamma folded into its rows: rows [0:Dp) act on
    # the real half of the recurrence slab, rows [Dp:2Dp) on the imag half.
    wo = jnp.zeros((D2p, Dp), f32)
    wo = wo.at[0:D, 0:D].set(gamma[:, None] * w_out[0:D, :])
    wo = wo.at[Dp:Dp + D, 0:D].set(gamma[:, None] * w_out[D:2 * D, :])
    bo = jnp.zeros((1, Dp), f32).at[0, 0:D].set(b_out)
    lam = jnp.zeros((2, Dp), f32)
    lam = lam.at[0, 0:D].set(lam_re).at[1, 0:D].set(lam_im)
    wi = wi.astype(jnp.bfloat16)
    wo = wo.astype(jnp.bfloat16)

    const = lambda b: (0, 0)
    # NOTE: for very large D the constant-index weight blocks could use
    # pipeline_mode=pl.Buffered(1) to halve their VMEM (their index_map never
    # changes); left at the default here and accounted for in _choose_bblk.
    out_t = pl.pallas_call(
        make_lru_kernel(unroll),
        out_shape=jax.ShapeDtypeStruct((T, Bp, Dp), out_dtype),
        grid_spec=pltpu.PrefetchScalarGridSpec(
            num_scalar_prefetch=0,
            grid=(Bp // Bblk,),
            in_specs=[
                pl.BlockSpec((T, Bblk, D), lambda b: (0, b, 0)),   # x (time-major)
                pl.BlockSpec((D, D2p), const),                     # fused w_in
                pl.BlockSpec((1, D2p), const),                     # fused b_in
                pl.BlockSpec((D2p, Dp), const),                    # fused w_out (gamma folded)
                pl.BlockSpec((1, Dp), const),                      # b_out
                pl.BlockSpec((2, Dp), const),                      # [lambda_re, lambda_im]
            ],
            out_specs=pl.BlockSpec((T, Bblk, Dp), lambda b: (0, b, 0)),
            scratch_shapes=[pltpu.VMEM((T, Bblk, D2p), jnp.float32)],
        ),
        compiler_params=pltpu.CompilerParams(
            # Batch blocks are independent -> v7x shards them across its 2 TCs.
            dimension_semantics=("parallel",),
            vmem_limit_bytes=int((vmem_cap * 9) // 10)),
    )(xt, wi, bi, wo, bo, lam)

    # TODO(synk): for very large T*D, add a second ("arbitrary") grid axis over
    # time carrying h in a small (Bblk, Dp) scratch instead of holding all T in VMEM.
    return jnp.transpose(out_t, (1, 0, 2))[:B, :, :D]


def lru_reference(x, w_in, b_in, w_out, b_out, v, theta, gamma):
    """Pure-JAX port of the PyTorch forward (log-depth parallel scan), for checking."""
    B, T, D = x.shape
    u = x @ w_in + b_in                       # (B, T, 2D)
    u = u.reshape(B, T, D, 2)
    uc = (u[..., 0] + 1j * u[..., 1]).astype(jnp.complex64)   # (B, T, D)
    log2_L = int(np.ceil(np.log2(T)))
    L = 2 ** log2_L
    uc = jnp.pad(uc, ((0, 0), (0, L - T), (0, 0)))
    xc = uc
    for i in range(1, log2_L + 1):
        l = 2 ** i
        xr = xc.reshape(B * L // l, l, D)
        x1, x2 = xr[:, :l // 2], xr[:, l // 2:]
        pos = jnp.arange(1, l // 2 + 1, dtype=jnp.float32)[:, None]
        lambs = jnp.exp(-pos * v + 1j * pos * theta)
        x2 = x2 + lambs * x1[:, -1:]
        xc = jnp.concatenate([x1, x2], axis=1).reshape(B, L, D)
    xc = xc[:, :T] * gamma.astype(jnp.complex64)
    z = jnp.concatenate([jnp.real(xc), jnp.imag(xc)], axis=-1)  # (B, T, 2D)
    out = z @ w_out + b_out
    return jax.nn.relu(out)


if __name__ == "__main__":
    B, T, D = 2, 8, 32   # batch, seq, in_features
    r_min, r_max = 0.9, 0.999

    key = jax.random.PRNGKey(0)
    k1, k2, k3, k4, k5, k6, k7 = jax.random.split(key, 7)

    # Deterministic parameter init (nn.Linear-style uniform bounds).
    bi_ = 1.0 / np.sqrt(D)
    w_in = jax.random.uniform(k1, (D, 2 * D), jnp.float32, -bi_, bi_)
    b_in = jax.random.uniform(k2, (2 * D,), jnp.float32, -bi_, bi_)
    bo_ = 1.0 / np.sqrt(2 * D)
    w_out = jax.random.uniform(k3, (2 * D, D), jnp.float32, -bo_, bo_)
    b_out = jax.random.uniform(k4, (D,), jnp.float32, -bo_, bo_)

    # LRU params (same construction as the module's __init__, deterministic here).
    u1 = jax.random.uniform(k5, (D,), jnp.float32)
    u2 = jax.random.uniform(k6, (D,), jnp.float32)
    v_log = jnp.log(-0.5 * jnp.log(u1 * (r_max ** 2 - r_min ** 2) + r_min ** 2))
    theta_log = jnp.log(u2 * np.pi * 2)
    gamma_log = jnp.log(jnp.sqrt(1 - jnp.exp(-jnp.exp(v_log)) ** 2))
    v = jnp.exp(v_log)
    theta = jnp.exp(theta_log)
    gamma = jnp.exp(gamma_log)

    x = jax.random.normal(k7, (B, T, D), jnp.float32)

    fwd = jax.jit(lru_forward)
    out = jax.block_until_ready(fwd(x, w_in, b_in, w_out, b_out, v, theta, gamma))
    ref = jax.block_until_ready(lru_reference(x, w_in, b_in, w_out, b_out, v, theta, gamma))
    # Loose tolerance covers bf16 MXU matmuls (f32 accumulation; recurrence kept
    # in f32), the gamma-folded bf16 output weights, and the sequential-vs-
    # log-depth-scan rounding-order difference.
    np.testing.assert_allclose(np.asarray(out), np.asarray(ref), rtol=2e-2, atol=2e-2)

    # dropout(p=0.0) is identity in eval; omitted.
    print("KERNEL_OK")
</pallas_src>

<mosaic_0001>
module attributes {stable_mosaic.version = 11 : i64} {
  func.func @lru_kernel(%arg0: i32, %arg1: memref<8x16x32xbf16, #tpu.memory_space<vmem>>, %arg2: memref<32x256xbf16, #tpu.memory_space<vmem>>, %arg3: memref<1x256xf32, #tpu.memory_space<vmem>>, %arg4: memref<256x128xbf16, #tpu.memory_space<vmem>>, %arg5: memref<1x128xf32, #tpu.memory_space<vmem>>, %arg6: memref<2x128xf32, #tpu.memory_space<vmem>>, %arg7: memref<8x16x128xf32, #tpu.memory_space<vmem>>, %arg8: memref<8x16x256xf32, #tpu.memory_space<vmem>>) attributes {dimension_semantics = [#tpu.dimension_semantics<parallel>], iteration_bounds = array<i64: 1>, scalar_prefetch = 0 : i64, scratch_operands = 1 : i64, tpu.core_type = #tpu.core_type<tc>, window_params = [{transform_indices = @transform_0, window_bounds = array<i64: 8, 16, 32>}, {pipeline_mode = #tpu.pipeline_mode<synchronous>, transform_indices = @transform_1, window_bounds = array<i64: 32, 256>}, {pipeline_mode = #tpu.pipeline_mode<synchronous>, transform_indices = @transform_2, window_bounds = array<i64: 1, 256>}, {pipeline_mode = #tpu.pipeline_mode<synchronous>, transform_indices = @transform_3, window_bounds = array<i64: 256, 128>}, {pipeline_mode = #tpu.pipeline_mode<synchronous>, transform_indices = @transform_4, window_bounds = array<i64: 1, 128>}, {pipeline_mode = #tpu.pipeline_mode<synchronous>, transform_indices = @transform_5, window_bounds = array<i64: 2, 128>}, {transform_indices = @transform_6, window_bounds = array<i64: 8, 16, 128>}]} {
    %c0 = arith.constant 0 : index
    %c0_0 = arith.constant 0 : index
    %c0_1 = arith.constant 0 : index
    %0 = vector.load %arg1[%c0, %c0_0, %c0_1] : memref<8x16x32xbf16, #tpu.memory_space<vmem>>, vector<8x16x32xbf16>
    %1 = vector.shape_cast %0 : vector<8x16x32xbf16> to vector<128x32xbf16>
    %c0_2 = arith.constant 0 : index
    %c0_3 = arith.constant 0 : index
    %2 = vector.load %arg2[%c0_2, %c0_3] : memref<32x256xbf16, #tpu.memory_space<vmem>>, vector<32x256xbf16>
    %cst = arith.constant dense<0.000000e+00> : vector<128x256xf32>
    %3 = tpu.matmul %1, %2, %cst {dimension_numbers = #tpu.dot_dimension_numbers<[1], [0], [0], [1], [0, 0, 1, 1], [], []>} : vector<128x32xbf16>, vector<32x256xbf16>, vector<128x256xf32> -> vector<128x256xf32>
    %c0_4 = arith.constant 0 : index
    %c0_5 = arith.constant 0 : index
    %4 = vector.load %arg3[%c0_4, %c0_5] : memref<1x256xf32, #tpu.memory_space<vmem>>, vector<1x256xf32>
    %5 = vector.broadcast %4 : vector<1x256xf32> to vector<128x256xf32>
    %6 = arith.addf %3, %5 : vector<128x256xf32>
    %7 = vector.shape_cast %6 : vector<128x256xf32> to vector<8x16x256xf32>
    %c0_6 = arith.constant 0 : index
    %c0_7 = arith.constant 0 : index
    %c0_8 = arith.constant 0 : index
    %8 = vector.load %arg8[%c0_6, %c0_7, %c0_8] : memref<8x16x256xf32, #tpu.memory_space<vmem>>, vector<8x16x256xf32>
    tpu.vector_store %arg8[%c0_6, %c0_7, %c0_8], %7 {strides = array<i32>} : memref<8x16x256xf32, #tpu.memory_space<vmem>>, vector<8x16x256xf32>,
    %c0_9 = arith.constant 0 : index
    %c0_10 = arith.constant 0 : index
    %9 = vector.load %arg6[%c0_9, %c0_10] : memref<2x128xf32, #tpu.memory_space<vmem>>, vector<1x128xf32>
    %10 = vector.shape_cast %9 : vector<1x128xf32> to vector<1x1x128xf32>
    %c1 = arith.constant 1 : index
    %c0_11 = arith.constant 0 : index
    %11 = vector.load %arg6[%c1, %c0_11] : memref<2x128xf32, #tpu.memory_space<vmem>>, vector<1x128xf32>
    %12 = vector.shape_cast %11 : vector<1x128xf32> to vector<1x1x128xf32>
    %c0_12 = arith.constant 0 : index
    %c0_13 = arith.constant 0 : index
    %c0_14 = arith.constant 0 : index
    %13 = vector.load %arg8[%c0_12, %c0_13, %c0_14] : memref<8x16x256xf32, #tpu.memory_space<vmem>>, vector<1x16x128xf32>
    %c0_15 = arith.constant 0 : index
    %c0_16 = arith.constant 0 : index
    %c128 = arith.constant 128 : index
    %14 = vector.load %arg8[%c0_15, %c0_16, %c128] : memref<8x16x256xf32, #tpu.memory_space<vmem>>, vector<1x16x128xf32>
    %c1_i32 = arith.constant 1 : i32
    %15 = arith.index_cast %c1_i32 : i32 to index
    %c0_17 = arith.constant 0 : index
    %c0_18 = arith.constant 0 : index
    %16 = vector.load %arg8[%15, %c0_17, %c0_18] : memref<8x16x256xf32, #tpu.memory_space<vmem>>, vector<1x16x128xf32>
    %17 = arith.index_cast %c1_i32 : i32 to index
    %c0_19 = arith.constant 0 : index
    %c128_20 = arith.constant 128 : index
    %18 = vector.load %arg8[%17, %c0_19, %c128_20] : memref<8x16x256xf32, #tpu.memory_space<vmem>>, vector<1x16x128xf32>
    %19 = vector.broadcast %10 : vector<1x1x128xf32> to vector<1x16x128xf32>
    %20 = arith.mulf %19, %13 : vector<1x16x128xf32>
    %21 = vector.broadcast %12 : vector<1x1x128xf32> to vector<1x16x128xf32>
    %22 = arith.mulf %21, %14 : vector<1x16x128xf32>
    %23 = arith.subf %20, %22 : vector<1x16x128xf32>
    %24 = arith.addf %23, %16 : vector<1x16x128xf32>
    %25 = vector.broadcast %10 : vector<1x1x128xf32> to vector<1x16x128xf32>
    %26 = arith.mulf %25, %14 : vector<1x16x128xf32>
    %27 = vector.broadcast %12 : vector<1x1x128xf32> to vector<1x16x128xf32>
    %28 = arith.mulf %27, %13 : vector<1x16x128xf32>
    %29 = arith.addf %26, %28 : vector<1x16x128xf32>
    %30 = arith.addf %29, %18 : vector<1x16x128xf32>
    %31 = arith.index_cast %c1_i32 : i32 to index
    %c0_21 = arith.constant 0 : index
    %c0_22 = arith.constant 0 : index
    %32 = vector.load %arg8[%31, %c0_21, %c0_22] : memref<8x16x256xf32, #tpu.memory_space<vmem>>, vector<1x16x128xf32>
    tpu.vector_store %arg8[%31, %c0_21, %c0_22], %24 {strides = array<i32>} : memref<8x16x256xf32, #tpu.memory_space<vmem>>, vector<1x16x128xf32>,
    %33 = arith.index_cast %c1_i32 : i32 to index
    %c0_23 = arith.constant 0 : index
    %c128_24 = arith.constant 128 : index
    %34 = vector.load %arg8[%33, %c0_23, %c128_24] : memref<8x16x256xf32, #tpu.memory_space<vmem>>, vector<1x16x128xf32>
    tpu.vector_store %arg8[%33, %c0_23, %c128_24], %30 {strides = array<i32>} : memref<8x16x256xf32, #tpu.memory_space<vmem>>, vector<1x16x128xf32>,
    %c2_i32 = arith.constant 2 : i32
    %35 = arith.index_cast %c2_i32 : i32 to index
    %c0_25 = arith.constant 0 : index
    %c0_26 = arith.constant 0 : index
    %36 = vector.load %arg8[%35, %c0_25, %c0_26] : memref<8x16x256xf32, #tpu.memory_space<vmem>>, vector<1x16x128xf32>
    %37 = arith.index_cast %c2_i32 : i32 to index
    %c0_27 = arith.constant 0 : index
    %c128_28 = arith.constant 128 : index
    %38 = vector.load %arg8[%37, %c0_27, %c128_28] : memref<8x16x256xf32, #tpu.memory_space<vmem>>, vector<1x16x128xf32>
    %39 = vector.broadcast %10 : vector<1x1x128xf32> to vector<1x16x128xf32>
    %40 = arith.mulf %39, %24 : vector<1x16x128xf32>
    %41 = vector.broadcast %12 : vector<1x1x128xf32> to vector<1x16x128xf32>
    %42 = arith.mulf %41, %30 : vector<1x16x128xf32>
    %43 = arith.subf %40, %42 : vector<1x16x128xf32>
    %44 = arith.addf %43, %36 : vector<1x16x128xf32>
    %45 = vector.broadcast %10 : vector<1x1x128xf32> to vector<1x16x128xf32>
    %46 = arith.mulf %45, %30 : vector<1x16x128xf32>
    %47 = vector.broadcast %12 : vector<1x1x128xf32> to vector<1x16x128xf32>
    %48 = arith.mulf %47, %24 : vector<1x16x128xf32>
    %49 = arith.addf %46, %48 : vector<1x16x128xf32>
    %50 = arith.addf %49, %38 : vector<1x16x128xf32>
    %51 = arith.index_cast %c2_i32 : i32 to index
    %c0_29 = arith.constant 0 : index
    %c0_30 = arith.constant 0 : index
    %52 = vector.load %arg8[%51, %c0_29, %c0_30] : memref<8x16x256xf32, #tpu.memory_space<vmem>>, vector<1x16x128xf32>
    tpu.vector_store %arg8[%51, %c0_29, %c0_30], %44 {strides = array<i32>} : memref<8x16x256xf32, #tpu.memory_space<vmem>>, vector<1x16x128xf32>,
    %53 = arith.index_cast %c2_i32 : i32 to index
    %c0_31 = arith.constant 0 : index
    %c128_32 = arith.constant 128 : index
    %54 = vector.load %arg8[%53, %c0_31, %c128_32] : memref<8x16x256xf32, #tpu.memory_space<vmem>>, vector<1x16x128xf32>
    tpu.vector_store %arg8[%53, %c0_31, %c128_32], %50 {strides = array<i32>} : memref<8x16x256xf32, #tpu.memory_space<vmem>>, vector<1x16x128xf32>,
    %c3_i32 = arith.constant 3 : i32
    %55 = arith.index_cast %c3_i32 : i32 to index
    %c0_33 = arith.constant 0 : index
    %c0_34 = arith.constant 0 : index
    %56 = vector.load %arg8[%55, %c0_33, %c0_34] : memref<8x16x256xf32, #tpu.memory_space<vmem>>, vector<1x16x128xf32>
    %57 = arith.index_cast %c3_i32 : i32 to index
    %c0_35 = arith.constant 0 : index
    %c128_36 = arith.constant 128 : index
    %58 = vector.load %arg8[%57, %c0_35, %c128_36] : memref<8x16x256xf32, #tpu.memory_space<vmem>>, vector<1x16x128xf32>
    %59 = vector.broadcast %10 : vector<1x1x128xf32> to vector<1x16x128xf32>
    %60 = arith.mulf %59, %44 : vector<1x16x128xf32>
    %61 = vector.broadcast %12 : vector<1x1x128xf32> to vector<1x16x128xf32>
    %62 = arith.mulf %61, %50 : vector<1x16x128xf32>
    %63 = arith.subf %60, %62 : vector<1x16x128xf32>
    %64 = arith.addf %63, %56 : vector<1x16x128xf32>
    %65 = vector.broadcast %10 : vector<1x1x128xf32> to vector<1x16x128xf32>
    %66 = arith.mulf %65, %50 : vector<1x16x128xf32>
    %67 = vector.broadcast %12 : vector<1x1x128xf32> to vector<1x16x128xf32>
    %68 = arith.mulf %67, %44 : vector<1x16x128xf32>
    %69 = arith.addf %66, %68 : vector<1x16x128xf32>
    %70 = arith.addf %69, %58 : vector<1x16x128xf32>
    %71 = arith.index_cast %c3_i32 : i32 to index
    %c0_37 = arith.constant 0 : index
    %c0_38 = arith.constant 0 : index
    %72 = vector.load %arg8[%71, %c0_37, %c0_38] : memref<8x16x256xf32, #tpu.memory_space<vmem>>, vector<1x16x128xf32>
    tpu.vector_store %arg8[%71, %c0_37, %c0_38], %64 {strides = array<i32>} : memref<8x16x256xf32, #tpu.memory_space<vmem>>, vector<1x16x128xf32>,
    %73 = arith.index_cast %c3_i32 : i32 to index
    %c0_39 = arith.constant 0 : index
    %c128_40 = arith.constant 128 : index
    %74 = vector.load %arg8[%73, %c0_39, %c128_40] : memref<8x16x256xf32, #tpu.memory_space<vmem>>, vector<1x16x128xf32>
    tpu.vector_store %arg8[%73, %c0_39, %c128_40], %70 {strides = array<i32>} : memref<8x16x256xf32, #tpu.memory_space<vmem>>, vector<1x16x128xf32>,
    %c4_i32 = arith.constant 4 : i32
    %75 = arith.index_cast %c4_i32 : i32 to index
    %c0_41 = arith.constant 0 : index
    %c0_42 = arith.constant 0 : index
    %76 = vector.load %arg8[%75, %c0_41, %c0_42] : memref<8x16x256xf32, #tpu.memory_space<vmem>>, vector<1x16x128xf32>
    %77 = arith.index_cast %c4_i32 : i32 to index
    %c0_43 = arith.constant 0 : index
    %c128_44 = arith.constant 128 : index
    %78 = vector.load %arg8[%77, %c0_43, %c128_44] : memref<8x16x256xf32, #tpu.memory_space<vmem>>, vector<1x16x128xf32>
    %79 = vector.broadcast %10 : vector<1x1x128xf32> to vector<1x16x128xf32>
    %80 = arith.mulf %79, %64 : vector<1x16x128xf32>
    %81 = vector.broadcast %12 : vector<1x1x128xf32> to vector<1x16x128xf32>
    %82 = arith.mulf %81, %70 : vector<1x16x128xf32>
    %83 = arith.subf %80, %82 : vector<1x16x128xf32>
    %84 = arith.addf %83, %76 : vector<1x16x128xf32>
    %85 = vector.broadcast %10 : vector<1x1x128xf32> to vector<1x16x128xf32>
    %86 = arith.mulf %85, %70 : vector<1x16x128xf32>
    %87 = vector.broadcast %12 : vector<1x1x128xf32> to vector<1x16x128xf32>
    %88 = arith.mulf %87, %64 : vector<1x16x128xf32>
    %89 = arith.addf %86, %88 : vector<1x16x128xf32>
    %90 = arith.addf %89, %78 : vector<1x16x128xf32>
    %91 = arith.index_cast %c4_i32 : i32 to index
    %c0_45 = arith.constant 0 : index
    %c0_46 = arith.constant 0 : index
    %92 = vector.load %arg8[%91, %c0_45, %c0_46] : memref<8x16x256xf32, #tpu.memory_space<vmem>>, vector<1x16x128xf32>
    tpu.vector_store %arg8[%91, %c0_45, %c0_46], %84 {strides = array<i32>} : memref<8x16x256xf32, #tpu.memory_space<vmem>>, vector<1x16x128xf32>,
    %93 = arith.index_cast %c4_i32 : i32 to index
    %c0_47 = arith.constant 0 : index
    %c128_48 = arith.constant 128 : index
    %94 = vector.load %arg8[%93, %c0_47, %c128_48] : memref<8x16x256xf32, #tpu.memory_space<vmem>>, vector<1x16x128xf32>
    tpu.vector_store %arg8[%93, %c0_47, %c128_48], %90 {strides = array<i32>} : memref<8x16x256xf32, #tpu.memory_space<vmem>>, vector<1x16x128xf32>,
    %c5_i32 = arith.constant 5 : i32
    %95 = arith.index_cast %c5_i32 : i32 to index
    %c0_49 = arith.constant 0 : index
    %c0_50 = arith.constant 0 : index
    %96 = vector.load %arg8[%95, %c0_49, %c0_50] : memref<8x16x256xf32, #tpu.memory_space<vmem>>, vector<1x16x128xf32>
    %97 = arith.index_cast %c5_i32 : i32 to index
    %c0_51 = arith.constant 0 : index
    %c128_52 = arith.constant 128 : index
    %98 = vector.load %arg8[%97, %c0_51, %c128_52] : memref<8x16x256xf32, #tpu.memory_space<vmem>>, vector<1x16x128xf32>
    %99 = vector.broadcast %10 : vector<1x1x128xf32> to vector<1x16x128xf32>
    %100 = arith.mulf %99, %84 : vector<1x16x128xf32>
    %101 = vector.broadcast %12 : vector<1x1x128xf32> to vector<1x16x128xf32>
    %102 = arith.mulf %101, %90 : vector<1x16x128xf32>
    %103 = arith.subf %100, %102 : vector<1x16x128xf32>
    %104 = arith.addf %103, %96 : vector<1x16x128xf32>
    %105 = vector.broadcast %10 : vector<1x1x128xf32> to vector<1x16x128xf32>
    %106 = arith.mulf %105, %90 : vector<1x16x128xf32>
    %107 = vector.broadcast %12 : vector<1x1x128xf32> to vector<1x16x128xf32>
    %108 = arith.mulf %107, %84 : vector<1x16x128xf32>
    %109 = arith.addf %106, %108 : vector<1x16x128xf32>
    %110 = arith.addf %109, %98 : vector<1x16x128xf32>
    %111 = arith.index_cast %c5_i32 : i32 to index
    %c0_53 = arith.constant 0 : index
    %c0_54 = arith.constant 0 : index
    %112 = vector.load %arg8[%111, %c0_53, %c0_54] : memref<8x16x256xf32, #tpu.memory_space<vmem>>, vector<1x16x128xf32>
    tpu.vector_store %arg8[%111, %c0_53, %c0_54], %104 {strides = array<i32>} : memref<8x16x256xf32, #tpu.memory_space<vmem>>, vector<1x16x128xf32>,
    %113 = arith.index_cast %c5_i32 : i32 to index
    %c0_55 = arith.constant 0 : index
    %c128_56 = arith.constant 128 : index
    %114 = vector.load %arg8[%113, %c0_55, %c128_56] : memref<8x16x256xf32, #tpu.memory_space<vmem>>, vector<1x16x128xf32>
    tpu.vector_store %arg8[%113, %c0_55, %c128_56], %110 {strides = array<i32>} : memref<8x16x256xf32, #tpu.memory_space<vmem>>, vector<1x16x128xf32>,
    %c6_i32 = arith.constant 6 : i32
    %115 = arith.index_cast %c6_i32 : i32 to index
    %c0_57 = arith.constant 0 : index
    %c0_58 = arith.constant 0 : index
    %116 = vector.load %arg8[%115, %c0_57, %c0_58] : memref<8x16x256xf32, #tpu.memory_space<vmem>>, vector<1x16x128xf32>
    %117 = arith.index_cast %c6_i32 : i32 to index
    %c0_59 = arith.constant 0 : index
    %c128_60 = arith.constant 128 : index
    %118 = vector.load %arg8[%117, %c0_59, %c128_60] : memref<8x16x256xf32, #tpu.memory_space<vmem>>, vector<1x16x128xf32>
    %119 = vector.broadcast %10 : vector<1x1x128xf32> to vector<1x16x128xf32>
    %120 = arith.mulf %119, %104 : vector<1x16x128xf32>
    %121 = vector.broadcast %12 : vector<1x1x128xf32> to vector<1x16x128xf32>
    %122 = arith.mulf %121, %110 : vector<1x16x128xf32>
    %123 = arith.subf %120, %122 : vector<1x16x128xf32>
    %124 = arith.addf %123, %116 : vector<1x16x128xf32>
    %125 = vector.broadcast %10 : vector<1x1x128xf32> to vector<1x16x128xf32>
    %126 = arith.mulf %125, %110 : vector<1x16x128xf32>
    %127 = vector.broadcast %12 : vector<1x1x128xf32> to vector<1x16x128xf32>
    %128 = arith.mulf %127, %104 : vector<1x16x128xf32>
    %129 = arith.addf %126, %128 : vector<1x16x128xf32>
    %130 = arith.addf %129, %118 : vector<1x16x128xf32>
    %131 = arith.index_cast %c6_i32 : i32 to index
    %c0_61 = arith.constant 0 : index
    %c0_62 = arith.constant 0 : index
    %132 = vector.load %arg8[%131, %c0_61, %c0_62] : memref<8x16x256xf32, #tpu.memory_space<vmem>>, vector<1x16x128xf32>
    tpu.vector_store %arg8[%131, %c0_61, %c0_62], %124 {strides = array<i32>} : memref<8x16x256xf32, #tpu.memory_space<vmem>>, vector<1x16x128xf32>,
    %133 = arith.index_cast %c6_i32 : i32 to index
    %c0_63 = arith.constant 0 : index
    %c128_64 = arith.constant 128 : index
    %134 = vector.load %arg8[%133, %c0_63, %c128_64] : memref<8x16x256xf32, #tpu.memory_space<vmem>>, vector<1x16x128xf32>
    tpu.vector_store %arg8[%133, %c0_63, %c128_64], %130 {strides = array<i32>} : memref<8x16x256xf32, #tpu.memory_space<vmem>>, vector<1x16x128xf32>,
    %c7_i32 = arith.constant 7 : i32
    %135 = arith.index_cast %c7_i32 : i32 to index
    %c0_65 = arith.constant 0 : index
    %c0_66 = arith.constant 0 : index
    %136 = vector.load %arg8[%135, %c0_65, %c0_66] : memref<8x16x256xf32, #tpu.memory_space<vmem>>, vector<1x16x128xf32>
    %137 = arith.index_cast %c7_i32 : i32 to index
    %c0_67 = arith.constant 0 : index
    %c128_68 = arith.constant 128 : index
    %138 = vector.load %arg8[%137, %c0_67, %c128_68] : memref<8x16x256xf32, #tpu.memory_space<vmem>>, vector<1x16x128xf32>
    %139 = vector.broadcast %10 : vector<1x1x128xf32> to vector<1x16x128xf32>
    %140 = arith.mulf %139, %124 : vector<1x16x128xf32>
    %141 = vector.broadcast %12 : vector<1x1x128xf32> to vector<1x16x128xf32>
    %142 = arith.mulf %141, %130 : vector<1x16x128xf32>
    %143 = arith.subf %140, %142 : vector<1x16x128xf32>
    %144 = arith.addf %143, %136 : vector<1x16x128xf32>
    %145 = vector.broadcast %10 : vector<1x1x128xf32> to vector<1x16x128xf32>
    %146 = arith.mulf %145, %130 : vector<1x16x128xf32>
    %147 = vector.broadcast %12 : vector<1x1x128xf32> to vector<1x16x128xf32>
    %148 = arith.mulf %147, %124 : vector<1x16x128xf32>
    %149 = arith.addf %146, %148 : vector<1x16x128xf32>
    %150 = arith.addf %149, %138 : vector<1x16x128xf32>
    %151 = arith.index_cast %c7_i32 : i32 to index
    %c0_69 = arith.constant 0 : index
    %c0_70 = arith.constant 0 : index
    %152 = vector.load %arg8[%151, %c0_69, %c0_70] : memref<8x16x256xf32, #tpu.memory_space<vmem>>, vector<1x16x128xf32>
    tpu.vector_store %arg8[%151, %c0_69, %c0_70], %144 {strides = array<i32>} : memref<8x16x256xf32, #tpu.memory_space<vmem>>, vector<1x16x128xf32>,
    %153 = arith.index_cast %c7_i32 : i32 to index
    %c0_71 = arith.constant 0 : index
    %c128_72 = arith.constant 128 : index
    %154 = vector.load %arg8[%153, %c0_71, %c128_72] : memref<8x16x256xf32, #tpu.memory_space<vmem>>, vector<1x16x128xf32>
    tpu.vector_store %arg8[%153, %c0_71, %c128_72], %150 {strides = array<i32>} : memref<8x16x256xf32, #tpu.memory_space<vmem>>, vector<1x16x128xf32>,
    %c7_i32_73 = arith.constant 7 : i32
    %c0_74 = arith.constant 0 : index
    %c0_75 = arith.constant 0 : index
    %c0_76 = arith.constant 0 : index
    %155 = vector.load %arg8[%c0_74, %c0_75, %c0_76] : memref<8x16x256xf32, #tpu.memory_space<vmem>>, vector<8x16x256xf32>
    %156 = vector.shape_cast %155 : vector<8x16x256xf32> to vector<128x256xf32>
    %157 = arith.truncf %156 : vector<128x256xf32> to vector<128x256xbf16>
    %c0_77 = arith.constant 0 : index
    %c0_78 = arith.constant 0 : index
    %158 = vector.load %arg4[%c0_77, %c0_78] : memref<256x128xbf16, #tpu.memory_space<vmem>>, vector<256x128xbf16>
    %cst_79 = arith.constant dense<0.000000e+00> : vector<128x128xf32>
    %159 = tpu.matmul %157, %158, %cst_79 {dimension_numbers = #tpu.dot_dimension_numbers<[1], [0], [0], [1], [0, 0, 1, 1], [], []>} : vector<128x256xbf16>, vector<256x128xbf16>, vector<128x128xf32> -> vector<128x128xf32>
    %c0_80 = arith.constant 0 : index
    %c0_81 = arith.constant 0 : index
    %160 = vector.load %arg5[%c0_80, %c0_81] : memref<1x128xf32, #tpu.memory_space<vmem>>, vector<1x128xf32>
    %161 = vector.broadcast %160 : vector<1x128xf32> to vector<128x128xf32>
    %162 = arith.addf %159, %161 : vector<128x128xf32>
    %cst_82 = arith.constant 0.000000e+00 : f32
    %163 = vector.broadcast %cst_82 : f32 to vector<128x128xf32>
    %164 = arith.maximumf %162, %163 : vector<128x128xf32>
    %165 = vector.shape_cast %164 : vector<128x128xf32> to vector<8x16x128xf32>
    %c0_83 = arith.constant 0 : index
    %c0_84 = arith.constant 0 : index
    %c0_85 = arith.constant 0 : index
    %166 = vector.load %arg7[%c0_83, %c0_84, %c0_85] : memref<8x16x128xf32, #tpu.memory_space<vmem>>, vector<8x16x128xf32>
    tpu.vector_store %arg7[%c0_83, %c0_84, %c0_85], %165 {strides = array<i32>} : memref<8x16x128xf32, #tpu.memory_space<vmem>>, vector<8x16x128xf32>,
    return
  }
  func.func @transform_0(%arg0: i32) -> (i32, i32, i32) {
    %c0_i32 = arith.constant 0 : i32
    %c0_i32_0 = arith.constant 0 : i32
    %c0_i32_1 = arith.constant 0 : i32
    return %c0_i32, %arg0, %c0_i32_0 : i32, i32, i32
  }
  func.func @transform_1(%arg0: i32) -> (i32, i32) {
    %c0_i32 = arith.constant 0 : i32
    %c0_i32_0 = arith.constant 0 : i32
    %c0_i32_1 = arith.constant 0 : i32
    return %c0_i32, %c0_i32_0 : i32, i32
  }
  func.func @transform_2(%arg0: i32) -> (i32, i32) {
    %c0_i32 = arith.constant 0 : i32
    %c0_i32_0 = arith.constant 0 : i32
    %c0_i32_1 = arith.constant 0 : i32
    return %c0_i32, %c0_i32_0 : i32, i32
  }
  func.func @transform_3(%arg0: i32) -> (i32, i32) {
    %c0_i32 = arith.constant 0 : i32
    %c0_i32_0 = arith.constant 0 : i32
    %c0_i32_1 = arith.constant 0 : i32
    return %c0_i32, %c0_i32_0 : i32, i32
  }
  func.func @transform_4(%arg0: i32) -> (i32, i32) {
    %c0_i32 = arith.constant 0 : i32
    %c0_i32_0 = arith.constant 0 : i32
    %c0_i32_1 = arith.constant 0 : i32
    return %c0_i32, %c0_i32_0 : i32, i32
  }
  func.func @transform_5(%arg0: i32) -> (i32, i32) {
    %c0_i32 = arith.constant 0 : i32
    %c0_i32_0 = arith.constant 0 : i32
    %c0_i32_1 = arith.constant 0 : i32
    return %c0_i32, %c0_i32_0 : i32, i32
  }
  func.func @transform_6(%arg0: i32) -> (i32, i32, i32) {
    %c0_i32 = arith.constant 0 : i32
    %c0_i32_0 = arith.constant 0 : i32
    %c0_i32_1 = arith.constant 0 : i32
    return %c0_i32, %arg0, %c0_i32_0 : i32, i32, i32
  }
}

</mosaic_0001>

<llo_original>
// kernel: lru_forward.1
$region0: #{lru_forward.1}
  #allocation0 [shape = 'u32[]', space=smem, size = 0x4, offset = 0x4, fixed_abs, tag = 'smem constant byte address 0x4 - core index']
  #allocation1 [shape = 'u32[144,128]{1,0:T(1,128)}', space=vmem, size = 0x12000, scoped, tag = 'internal scratch']
  #allocation2 [shape = 'f32[8,16,256]{2,1,0:T(8,128)}', space=vmem, size = 0x20000, scoped, tag = 'scratch operand']
  %s0 = inlined_call_operand.vmem [shape: bf16[8,16,32], index: 0, kind: input, shape index: {}]
  %s1 = inlined_call_operand.vmem [shape: bf16[32,256], index: 1, kind: input, shape index: {}]
  %s2 = inlined_call_operand.vmem [shape: f32[1,256], index: 2, kind: input, shape index: {}]
  %s3 = inlined_call_operand.vmem [shape: bf16[256,128], index: 3, kind: input, shape index: {}]
  %s4 = inlined_call_operand.vmem [shape: f32[1,128], index: 4, kind: input, shape index: {}]
  %s5 = inlined_call_operand.vmem [shape: f32[2,128], index: 5, kind: input, shape index: {}]
  %s6 = inlined_call_operand.vmem [shape: f32[8,16,128], index: 6, kind: output, shape index: {}]
  %s7 = sld [smem:[#allocation0]]
  $region34: #{lru_forward.1} parent=0
    _
  %s9 = ssub.s32 1, %s7
  %s10 = scalar_select 0, %s9, %s7
  // Predicated region
  $region2: #{lru_forward.1} parent=0 // pred_check
    _
  $region3: #{lru_forward.1} parent=0 // pred_check_branch
    %12 = sbr.rel (0) target = $region5
  $region4: #{lru_forward.1} parent=0 // pred_region
    _
  $region5: #{lru_forward.1} parent=0 // pred_fallthru
    _
  // Predicated region
  $region6: #{lru_forward.1} parent=0 // pred_check
    _
  $region7: #{lru_forward.1} parent=0 // pred_check_branch
    %14 = sbr.rel (0) target = $region9
  $region8: #{lru_forward.1} parent=0 // pred_region
    _
  $region9: #{lru_forward.1} parent=0 // pred_fallthru
    _
  // Predicated region
  $region10: #{lru_forward.1} parent=0 // pred_check
    _
  $region11: #{lru_forward.1} parent=0 // pred_check_branch
    %16 = sbr.rel (0) target = $region13
  $region12: #{lru_forward.1} parent=0 // pred_region
    _
  $region13: #{lru_forward.1} parent=0 // pred_fallthru
    _
  // Predicated region
  $region14: #{lru_forward.1} parent=0 // pred_check
    _
  $region15: #{lru_forward.1} parent=0 // pred_check_branch
    %18 = sbr.rel (0) target = $region17
  $region16: #{lru_forward.1} parent=0 // pred_region
    _
  $region17: #{lru_forward.1} parent=0 // pred_fallthru
    _
  // Predicated region
  $region18: #{lru_forward.1} parent=0 // pred_check
    _
  $region19: #{lru_forward.1} parent=0 // pred_check_branch
    %20 = sbr.rel (0) target = $region21
  $region20: #{lru_forward.1} parent=0 // pred_region
    _
  $region21: #{lru_forward.1} parent=0 // pred_fallthru
    _
  // Predicated region
  $region22: #{lru_forward.1} parent=0 // pred_check
    _
  $region23: #{lru_forward.1} parent=0 // pred_check_branch
    %22 = sbr.rel (0) target = $region25
  $region24: #{lru_forward.1} parent=0 // pred_region
    _
  $region25: #{lru_forward.1} parent=0 // pred_fallthru
    _
  %v24 = vld [vmem:[%s0] sm:$0xf]
  %v25 = vld [vmem:[%s0 + $0x4] sm:$0xf]
  %v26 = vld [vmem:[%s0 + $0x8] sm:$0xf]
  %v27 = vld [vmem:[%s0 + $0xc] sm:$0xf]
  %v28 = vld [vmem:[%s0 + $0x10] sm:$0xf]
  %v29 = vld [vmem:[%s0 + $0x14] sm:$0xf]
  %v30 = vld [vmem:[%s0 + $0x18] sm:$0xf]
  %v31 = vld [vmem:[%s0 + $0x1c] sm:$0xf]
  %v32 = vld [vmem:[%s0 + $0x20] sm:$0xf]
  %v33 = vld [vmem:[%s0 + $0x24] sm:$0xf]
  %v34 = vld [vmem:[%s0 + $0x28] sm:$0xf]
  %v35 = vld [vmem:[%s0 + $0x2c] sm:$0xf]
  %v36 = vld [vmem:[%s0 + $0x30] sm:$0xf]
  %v37 = vld [vmem:[%s0 + $0x34] sm:$0xf]
  %v38 = vld [vmem:[%s0 + $0x38] sm:$0xf]
  %v39 = vld [vmem:[%s0 + $0x3c] sm:$0xf]
  %v40 = vld [vmem:[%s1] sm:$0xff]
  %v41 = vld [vmem:[%s1 + $0x8] sm:$0xff]
  %v42 = vld [vmem:[%s1 + $0x10] sm:$0xff]
  %v43 = vld [vmem:[%s1 + $0x18] sm:$0xff]
  %v44 = vld [vmem:[%s2] sm:$0x3]
  %v46 = vlaneseq
  %v47 = vshrl.u32 %v46, 7
  %v48 = vsub.s32 0, %v47
  %v49 = vrot.slane %v44, %v48
  %v50 = vlaneseq
  %v51 = vshrl.u32 %v50, 7
  %v52 = vsub.s32 1, %v51
  %v53 = vrot.slane %v44, %v52
  %v72 = vunpack.c.l.b16 %v24
  %v73 = vunpack.c.l.b16 %v25
  %v74 = vunpack.c.l.b16 %v26
  %v75 = vunpack.c.l.b16 %v27
  %v76 = vunpack.c.l.b16 %v28
  %v77 = vunpack.c.l.b16 %v29
  %v78 = vunpack.c.l.b16 %v30
  %v79 = vunpack.c.l.b16 %v31
  %v80 = vunpack.c.l.b16 %v32
  %v81 = vunpack.c.l.b16 %v33
  %v82 = vunpack.c.l.b16 %v34
  %v83 = vunpack.c.l.b16 %v35
  %v84 = vunpack.c.l.b16 %v36
  %v85 = vunpack.c.l.b16 %v37
  %v86 = vunpack.c.l.b16 %v38
  %v87 = vunpack.c.l.b16 %v39
  %v88 = vpack.c.b16 %v73, %v72
  %v89 = vpack.c.b16 %v75, %v74
  %v90 = vpack.c.b16 %v77, %v76
  %v91 = vpack.c.b16 %v79, %v78
  %v92 = vpack.c.b16 %v81, %v80
  %v93 = vpack.c.b16 %v83, %v82
  %v94 = vpack.c.b16 %v85, %v84
  %v95 = vpack.c.b16 %v87, %v86
  %v100 = vunpack.c.l.b16 %v40
  %v101 = vunpack.c.h.b16 %v40
  %v102 = vunpack.c.l.b16 %v41
  %v103 = vunpack.c.h.b16 %v41
  %v104 = vunpack.c.l.b16 %v42
  %v105 = vunpack.c.h.b16 %v42
  %v106 = vunpack.c.l.b16 %v43
  %v107 = vunpack.c.h.b16 %v43
  %v108 = vpack.c.b16 %v102, %v100
  %v109 = vpack.c.b16 %v103, %v101
  %v110 = vpack.c.b16 %v106, %v104
  %v111 = vpack.c.b16 %v107, %v105
  %vm116 = vcmask 261120
  %v118 = vsel %vm116, %v88, 0
  %v121 = vsel %vm116, %v89, 0
  %v124 = vsel %vm116, %v90, 0
  %v127 = vsel %vm116, %v91, 0
  %v130 = vsel %vm116, %v92, 0
  %v133 = vsel %vm116, %v93, 0
  %v136 = vsel %vm116, %v94, 0
  %v139 = vsel %vm116, %v95, 0
  %141 = vmatprep.subr.bf16.mxu0 %v109
  %142 = vmatpush1.bf16.msra.mxu0 %v108
  %143 = vmatprep.subr.bf16.mxu0 %v111
  %144 = vmatpush1.bf16.msra.mxu0 %v110
  %145 = vmatprep.subr.bf16.mxu0 0
  %146 = vmatpush1.bf16.msra.mxu0 0
  %147 = vmatprep.subr.bf16.mxu0 0
  %148 = vmatpush1.bf16.msra.mxu0 0
  %149 = vmatprep.subr.bf16.mxu0 0
  %150 = vmatpush1.bf16.msra.mxu0 0
  %151 = vmatprep.subr.bf16.mxu0 0
  %152 = vmatpush1.bf16.msra.mxu0 0
  %153 = vmatprep.subr.bf16.mxu0 0
  %154 = vmatpush1.bf16.msra.mxu0 0
  %155 = vmatprep.subr.bf16.mxu0 0
  %156 = vmatpush1.bf16.msra.mxu0 0
  %157 = vmatprep.subr.bf16.mxu0 0
  %158 = vmatpush1.bf16.msra.mxu0 0
  %159 = vmatprep.subr.bf16.mxu0 0
  %160 = vmatpush1.bf16.msra.mxu0 0
  %161 = vmatprep.subr.bf16.mxu0 0
  %162 = vmatpush1.bf16.msra.mxu0 0
  %163 = vmatprep.subr.bf16.mxu0 0
  %164 = vmatpush1.bf16.msra.mxu0 0
  %165 = vmatprep.subr.bf16.mxu0 0
  %166 = vmatpush1.bf16.msra.mxu0 0
  %167 = vmatprep.subr.bf16.mxu0 0
  %168 = vmatpush1.bf16.msra.mxu0 0
  %169 = vmatprep.subr.bf16.mxu0 0
  %170 = vmatpush1.bf16.msra.mxu0 0
  %171 = vmatprep.subr.bf16.mxu0 0
  %172 = vmatpush1.bf16.msra.mxu0 0
  %173 = vmatprep.mubr.bf16.mxu0 0
  %174 = vmatmul.mubr.bf16.gmra.mrb[0].mxu0 %v118
  %v175 = vpop.f32.mrb[0].mxu0
  %v176 = vadd.f32 %v49, %v175
  %v177 = vpop.f32.mrb[0].mxu0
  %v178 = vadd.f32 %v53, %v177
  %v179 = vpop.f32.mrb[0].mxu0
  %v180 = vadd.f32 %v49, %v179
  %v181 = vpop.f32.mrb[0].mxu0
  %v182 = vadd.f32 %v53, %v181
  %183 = vmatprep.mubr.bf16.mxu0 0
  %184 = vmatmul.mubr.bf16.gmra.mrb[0].mxu0 %v121
  %v185 = vpop.f32.mrb[0].mxu0
  %v186 = vadd.f32 %v49, %v185
  %v187 = vpop.f32.mrb[0].mxu0
  %v188 = vadd.f32 %v53, %v187
  %v189 = vpop.f32.mrb[0].mxu0
  %v190 = vadd.f32 %v49, %v189
  %v191 = vpop.f32.mrb[0].mxu0
  %v192 = vadd.f32 %v53, %v191
  %193 = vmatprep.mubr.bf16.mxu0 0
  %194 = vmatmul.mubr.bf16.gmra.mrb[0].mxu0 %v124
  %v195 = vpop.f32.mrb[0].mxu0
  %v196 = vadd.f32 %v49, %v195
  %v197 = vpop.f32.mrb[0].mxu0
  %v198 = vadd.f32 %v53, %v197
  %v199 = vpop.f32.mrb[0].mxu0
  %v200 = vadd.f32 %v49, %v199
  %v201 = vpop.f32.mrb[0].mxu0
  %v202 = vadd.f32 %v53, %v201
  %203 = vmatprep.mubr.bf16.mxu0 0
  %204 = vmatmul.mubr.bf16.gmra.mrb[0].mxu0 %v127
  %v205 = vpop.f32.mrb[0].mxu0
  %v206 = vadd.f32 %v49, %v205
  %v207 = vpop.f32.mrb[0].mxu0
  %v208 = vadd.f32 %v53, %v207
  %v209 = vpop.f32.mrb[0].mxu0
  %v210 = vadd.f32 %v49, %v209
  %v211 = vpop.f32.mrb[0].mxu0
  %v212 = vadd.f32 %v53, %v211
  %213 = vmatprep.mubr.bf16.mxu0 0
  %214 = vmatmul.mubr.bf16.gmra.mrb[0].mxu0 %v130
  %v215 = vpop.f32.mrb[0].mxu0
  %v216 = vadd.f32 %v49, %v215
  %v217 = vpop.f32.mrb[0].mxu0
  %v218 = vadd.f32 %v53, %v217
  %v219 = vpop.f32.mrb[0].mxu0
  %v220 = vadd.f32 %v49, %v219
  %v221 = vpop.f32.mrb[0].mxu0
  %v222 = vadd.f32 %v53, %v221
  %223 = vmatprep.mubr.bf16.mxu0 0
  %224 = vmatmul.mubr.bf16.gmra.mrb[0].mxu0 %v133
  %v225 = vpop.f32.mrb[0].mxu0
  %v226 = vadd.f32 %v49, %v225
  %v227 = vpop.f32.mrb[0].mxu0
  %v228 = vadd.f32 %v53, %v227
  %v229 = vpop.f32.mrb[0].mxu0
  %v230 = vadd.f32 %v49, %v229
  %v231 = vpop.f32.mrb[0].mxu0
  %v232 = vadd.f32 %v53, %v231
  %233 = vmatprep.mubr.bf16.mxu0 0
  %234 = vmatmul.mubr.bf16.gmra.mrb[0].mxu0 %v136
  %v235 = vpop.f32.mrb[0].mxu0
  %v236 = vadd.f32 %v49, %v235
  %v237 = vpop.f32.mrb[0].mxu0
  %v238 = vadd.f32 %v53, %v237
  %v239 = vpop.f32.mrb[0].mxu0
  %v240 = vadd.f32 %v49, %v239
  %v241 = vpop.f32.mrb[0].mxu0
  %v242 = vadd.f32 %v53, %v241
  %243 = vmatprep.mubr.bf16.mxu0 0
  %244 = vmatmul.mubr.bf16.gmra.mrb[0].mxu0 %v139
  %v245 = vpop.f32.mrb[0].mxu0
  %v246 = vadd.f32 %v49, %v245
  %v247 = vpop.f32.mrb[0].mxu0
  %v248 = vadd.f32 %v53, %v247
  %v249 = vpop.f32.mrb[0].mxu0
  %v250 = vadd.f32 %v49, %v249
  %v251 = vpop.f32.mrb[0].mxu0
  %v252 = vadd.f32 %v53, %v251
  %253 = vdwg.mxu0
  %254 = vst [vmem:[#allocation2] sm:$0xff] %v176
  %255 = vst [vmem:[#allocation2 + $0x8] sm:$0xff] %v178
  %256 = vst [vmem:[#allocation2 + $0x10] sm:$0xff] %v180
  %257 = vst [vmem:[#allocation2 + $0x18] sm:$0xff] %v182
  %258 = vst [vmem:[#allocation2 + $0x20] sm:$0xff] %v186
  %259 = vst [vmem:[#allocation2 + $0x28] sm:$0xff] %v188
  %260 = vst [vmem:[#allocation2 + $0x30] sm:$0xff] %v190
  %261 = vst [vmem:[#allocation2 + $0x38] sm:$0xff] %v192
  %262 = vst [vmem:[#allocation2 + $0x40] sm:$0xff] %v196
  %263 = vst [vmem:[#allocation2 + $0x48] sm:$0xff] %v198
  %264 = vst [vmem:[#allocation2 + $0x50] sm:$0xff] %v200
  %265 = vst [vmem:[#allocation2 + $0x58] sm:$0xff] %v202
  %266 = vst [vmem:[#allocation2 + $0x60] sm:$0xff] %v206
  %267 = vst [vmem:[#allocation2 + $0x68] sm:$0xff] %v208
  %268 = vst [vmem:[#allocation2 + $0x70] sm:$0xff] %v210
  %269 = vst [vmem:[#allocation2 + $0x78] sm:$0xff] %v212
  %270 = vst [vmem:[#allocation2 + $0x80] sm:$0xff] %v216
  %271 = vst [vmem:[#allocation2 + $0x88] sm:$0xff] %v218
  %272 = vst [vmem:[#allocation2 + $0x90] sm:$0xff] %v220
  %273 = vst [vmem:[#allocation2 + $0x98] sm:$0xff] %v222
  %274 = vst [vmem:[#allocation2 + $0xa0] sm:$0xff] %v226
  %275 = vst [vmem:[#allocation2 + $0xa8] sm:$0xff] %v228
  %276 = vst [vmem:[#allocation2 + $0xb0] sm:$0xff] %v230
  %277 = vst [vmem:[#allocation2 + $0xb8] sm:$0xff] %v232
  %278 = vst [vmem:[#allocation2 + $0xc0] sm:$0xff] %v236
  %279 = vst [vmem:[#allocation2 + $0xc8] sm:$0xff] %v238
  %280 = vst [vmem:[#allocation2 + $0xd0] sm:$0xff] %v240
  %281 = vst [vmem:[#allocation2 + $0xd8] sm:$0xff] %v242
  %282 = vst [vmem:[#allocation2 + $0xe0] sm:$0xff] %v246
  %283 = vst [vmem:[#allocation2 + $0xe8] sm:$0xff] %v248
  %284 = vst [vmem:[#allocation2 + $0xf0] sm:$0xff] %v250
  %285 = vst [vmem:[#allocation2 + $0xf8] sm:$0xff] %v252
  %v286 = vld [vmem:[%s5] sm:$0x1]
  %v287 = vld [vmem:[%s5 + $0x1] sm:$0x1]
  %v288 = vld [vmem:[#allocation2] sm:$0xff]
  %v289 = vld [vmem:[#allocation2 + $0x10] sm:$0xff]
  %v290 = vld [vmem:[#allocation2 + $0x8] sm:$0xff]
  %v291 = vld [vmem:[#allocation2 + $0x18] sm:$0xff]
  %s292 = scalar_lea.vmem [#allocation2], 32
  %v293 = vld [vmem:[%s292] sm:$0xff]
  %v294 = vld [vmem:[%s292 + $0x10] sm:$0xff]
  %v295 = vld [vmem:[%s292 + $0x8] sm:$0xff]
  %v296 = vld [vmem:[%s292 + $0x18] sm:$0xff]
  %v297 = vlaneseq
  %v298 = vshrl.u32 %v297, 7
  %v299 = vsub.s32 0, %v298
  %v300 = vrot.slane %v286, %v299
  %v301 = vmul.f32 %v300, %v288
  %v302 = vmul.f32 %v300, %v289
  %v303 = vlaneseq
  %v304 = vshrl.u32 %v303, 7
  %v305 = vsub.s32 0, %v304
  %v306 = vrot.slane %v287, %v305
  %v307 = vmul.f32 %v306, %v290
  %v308 = vmul.f32 %v306, %v291
  %v309 = vsub.f32 %v301, %v307
  %v310 = vsub.f32 %v302, %v308
  %v311 = vadd.f32 %v309, %v293
  %v312 = vadd.f32 %v310, %v294
  %v313 = vmul.f32 %v300, %v290
  %v314 = vmul.f32 %v300, %v291
  %v315 = vmul.f32 %v306, %v288
  %v316 = vmul.f32 %v306, %v289
  %v317 = vadd.f32 %v313, %v315
  %v318 = vadd.f32 %v314, %v316
  %v319 = vadd.f32 %v317, %v295
  %v320 = vadd.f32 %v318, %v296
  %321 = vst [vmem:[%s292] sm:$0xff] %v311
  %322 = vst [vmem:[%s292 + $0x10] sm:$0xff] %v312
  %323 = vst [vmem:[%s292 + $0x8] sm:$0xff] %v319
  %324 = vst [vmem:[%s292 + $0x18] sm:$0xff] %v320
  %s325 = scalar_lea.vmem [#allocation2], 64
  %v326 = vld [vmem:[%s325] sm:$0xff]
  %v327 = vld [vmem:[%s325 + $0x10] sm:$0xff]
  %v328 = vld [vmem:[%s325 + $0x8] sm:$0xff]
  %v329 = vld [vmem:[%s325 + $0x18] sm:$0xff]
  %v330 = vmul.f32 %v300, %v311
  %v331 = vmul.f32 %v300, %v312
  %v332 = vmul.f32 %v306, %v319
  %v333 = vmul.f32 %v306, %v320
  %v334 = vsub.f32 %v330, %v332
  %v335 = vsub.f32 %v331, %v333
  %v336 = vadd.f32 %v334, %v326
  %v337 = vadd.f32 %v335, %v327
  %v338 = vmul.f32 %v300, %v319
  %v339 = vmul.f32 %v300, %v320
  %v340 = vmul.f32 %v306, %v311
  %v341 = vmul.f32 %v306, %v312
  %v342 = vadd.f32 %v338, %v340
  %v343 = vadd.f32 %v339, %v341
  %v344 = vadd.f32 %v342, %v328
  %v345 = vadd.f32 %v343, %v329
  %346 = vst [vmem:[%s325] sm:$0xff] %v336
  %347 = vst [vmem:[%s325 + $0x10] sm:$0xff] %v337
  %348 = vst [vmem:[%s325 + $0x8] sm:$0xff] %v344
  %349 = vst [vmem:[%s325 + $0x18] sm:$0xff] %v345
  %s350 = scalar_lea.vmem [#allocation2], 96
  %v351 = vld [vmem:[%s350] sm:$0xff]
  %v352 = vld [vmem:[%s350 + $0x10] sm:$0xff]
  %v353 = vld [vmem:[%s350 + $0x8] sm:$0xff]
  %v354 = vld [vmem:[%s350 + $0x18] sm:$0xff]
  %v355 = vmul.f32 %v300, %v336
  %v356 = vmul.f32 %v300, %v337
  %v357 = vmul.f32 %v306, %v344
  %v358 = vmul.f32 %v306, %v345
  %v359 = vsub.f32 %v355, %v357
  %v360 = vsub.f32 %v356, %v358
  %v361 = vadd.f32 %v359, %v351
  %v362 = vadd.f32 %v360, %v352
  %v363 = vmul.f32 %v300, %v344
  %v364 = vmul.f32 %v300, %v345
  %v365 = vmul.f32 %v306, %v336
  %v366 = vmul.f32 %v306, %v337
  %v367 = vadd.f32 %v363, %v365
  %v368 = vadd.f32 %v364, %v366
  %v369 = vadd.f32 %v367, %v353
  %v370 = vadd.f32 %v368, %v354
  %371 = vst [vmem:[%s350] sm:$0xff] %v361
  %372 = vst [vmem:[%s350 + $0x10] sm:$0xff] %v362
  %373 = vst [vmem:[%s350 + $0x8] sm:$0xff] %v369
  %374 = vst [vmem:[%s350 + $0x18] sm:$0xff] %v370
  %s375 = scalar_lea.vmem [#allocation2], 128
  %v376 = vld [vmem:[%s375] sm:$0xff]
  %v377 = vld [vmem:[%s375 + $0x10] sm:$0xff]
  %v378 = vld [vmem:[%s375 + $0x8] sm:$0xff]
  %v379 = vld [vmem:[%s375 + $0x18] sm:$0xff]
  %v380 = vmul.f32 %v300, %v361
  %v381 = vmul.f32 %v300, %v362
  %v382 = vmul.f32 %v306, %v369
  %v383 = vmul.f32 %v306, %v370
  %v384 = vsub.f32 %v380, %v382
  %v385 = vsub.f32 %v381, %v383
  %v386 = vadd.f32 %v384, %v376
  %v387 = vadd.f32 %v385, %v377
  %v388 = vmul.f32 %v300, %v369
  %v389 = vmul.f32 %v300, %v370
  %v390 = vmul.f32 %v306, %v361
  %v391 = vmul.f32 %v306, %v362
  %v392 = vadd.f32 %v388, %v390
  %v393 = vadd.f32 %v389, %v391
  %v394 = vadd.f32 %v392, %v378
  %v395 = vadd.f32 %v393, %v379
  %396 = vst [vmem:[%s375] sm:$0xff] %v386
  %397 = vst [vmem:[%s375 + $0x10] sm:$0xff] %v387
  %398 = vst [vmem:[%s375 + $0x8] sm:$0xff] %v394
  %399 = vst [vmem:[%s375 + $0x18] sm:$0xff] %v395
  %s400 = scalar_lea.vmem [#allocation2], 160
  %v401 = vld [vmem:[%s400] sm:$0xff]
  %v402 = vld [vmem:[%s400 + $0x10] sm:$0xff]
  %v403 = vld [vmem:[%s400 + $0x8] sm:$0xff]
  %v404 = vld [vmem:[%s400 + $0x18] sm:$0xff]
  %v405 = vmul.f32 %v300, %v386
  %v406 = vmul.f32 %v300, %v387
  %v407 = vmul.f32 %v306, %v394
  %v408 = vmul.f32 %v306, %v395
  %v409 = vsub.f32 %v405, %v407
  %v410 = vsub.f32 %v406, %v408
  %v411 = vadd.f32 %v409, %v401
  %v412 = vadd.f32 %v410, %v402
  %v413 = vmul.f32 %v300, %v394
  %v414 = vmul.f32 %v300, %v395
  %v415 = vmul.f32 %v306, %v386
  %v416 = vmul.f32 %v306, %v387
  %v417 = vadd.f32 %v413, %v415
  %v418 = vadd.f32 %v414, %v416
  %v419 = vadd.f32 %v417, %v403
  %v420 = vadd.f32 %v418, %v404
  %421 = vst [vmem:[%s400] sm:$0xff] %v411
  %422 = vst [vmem:[%s400 + $0x10] sm:$0xff] %v412
  %423 = vst [vmem:[%s400 + $0x8] sm:$0xff] %v419
  %424 = vst [vmem:[%s400 + $0x18] sm:$0xff] %v420
  %s425 = scalar_lea.vmem [#allocation2], 192
  %v426 = vld [vmem:[%s425] sm:$0xff]
  %v427 = vld [vmem:[%s425 + $0x10] sm:$0xff]
  %v428 = vld [vmem:[%s425 + $0x8] sm:$0xff]
  %v429 = vld [vmem:[%s425 + $0x18] sm:$0xff]
  %v430 = vmul.f32 %v300, %v411
  %v431 = vmul.f32 %v300, %v412
  %v432 = vmul.f32 %v306, %v419
  %v433 = vmul.f32 %v306, %v420
  %v434 = vsub.f32 %v430, %v432
  %v435 = vsub.f32 %v431, %v433
  %v436 = vadd.f32 %v434, %v426
  %v437 = vadd.f32 %v435, %v427
  %v438 = vmul.f32 %v300, %v419
  %v439 = vmul.f32 %v300, %v420
  %v440 = vmul.f32 %v306, %v411
  %v441 = vmul.f32 %v306, %v412
  %v442 = vadd.f32 %v438, %v440
  %v443 = vadd.f32 %v439, %v441
  %v444 = vadd.f32 %v442, %v428
  %v445 = vadd.f32 %v443, %v429
  %446 = vst [vmem:[%s425] sm:$0xff] %v436
  %447 = vst [vmem:[%s425 + $0x10] sm:$0xff] %v437
  %448 = vst [vmem:[%s425 + $0x8] sm:$0xff] %v444
  %449 = vst [vmem:[%s425 + $0x18] sm:$0xff] %v445
  %s450 = scalar_lea.vmem [#allocation2], 224
  %v451 = vld [vmem:[%s450] sm:$0xff]
  %v452 = vld [vmem:[%s450 + $0x10] sm:$0xff]
  %v453 = vld [vmem:[%s450 + $0x8] sm:$0xff]
  %v454 = vld [vmem:[%s450 + $0x18] sm:$0xff]
  %v455 = vmul.f32 %v300, %v436
  %v456 = vmul.f32 %v300, %v437
  %v457 = vmul.f32 %v306, %v444
  %v458 = vmul.f32 %v306, %v445
  %v459 = vsub.f32 %v455, %v457
  %v460 = vsub.f32 %v456, %v458
  %v461 = vadd.f32 %v459, %v451
  %v462 = vadd.f32 %v460, %v452
  %v463 = vmul.f32 %v300, %v444
  %v464 = vmul.f32 %v300, %v445
  %v465 = vmul.f32 %v306, %v436
  %v466 = vmul.f32 %v306, %v437
  %v467 = vadd.f32 %v463, %v465
  %v468 = vadd.f32 %v464, %v466
  %v469 = vadd.f32 %v467, %v453
  %v470 = vadd.f32 %v468, %v454
  %471 = vst [vmem:[%s450] sm:$0xff] %v461
  %472 = vst [vmem:[%s450 + $0x10] sm:$0xff] %v462
  %473 = vst [vmem:[%s450 + $0x8] sm:$0xff] %v469
  %474 = vst [vmem:[%s450 + $0x18] sm:$0xff] %v470
  %v475 = vld [vmem:[#allocation2] sm:$0xff]
  %v476 = vld [vmem:[#allocation2 + $0x8] sm:$0xff]
  %v477 = vld [vmem:[#allocation2 + $0x10] sm:$0xff]
  %v478 = vld [vmem:[#allocation2 + $0x18] sm:$0xff]
  %v479 = vld [vmem:[#allocation2 + $0x20] sm:$0xff]
  %v480 = vld [vmem:[#allocation2 + $0x28] sm:$0xff]
  %v481 = vld [vmem:[#allocation2 + $0x30] sm:$0xff]
  %v482 = vld [vmem:[#allocation2 + $0x38] sm:$0xff]
  %v483 = vld [vmem:[#allocation2 + $0x40] sm:$0xff]
  %v484 = vld [vmem:[#allocation2 + $0x48] sm:$0xff]
  %v485 = vld [vmem:[#allocation2 + $0x50] sm:$0xff]
  %v486 = vld [vmem:[#allocation2 + $0x58] sm:$0xff]
  %v487 = vld [vmem:[#allocation2 + $0x60] sm:$0xff]
  %v488 = vld [vmem:[#allocation2 + $0x68] sm:$0xff]
  %v489 = vld [vmem:[#allocation2 + $0x70] sm:$0xff]
  %v490 = vld [vmem:[#allocation2 + $0x78] sm:$0xff]
  %v491 = vld [vmem:[#allocation2 + $0x80] sm:$0xff]
  %v492 = vld [vmem:[#allocation2 + $0x88] sm:$0xff]
  %v493 = vld [vmem:[#allocation2 + $0x90] sm:$0xff]
  %v494 = vld [vmem:[#allocation2 + $0x98] sm:$0xff]
  %v495 = vld [vmem:[#allocation2 + $0xa0] sm:$0xff]
  %v496 = vld [vmem:[#allocation2 + $0xa8] sm:$0xff]
  %v497 = vld [vmem:[#allocation2 + $0xb0] sm:$0xff]
  %v498 = vld [vmem:[#allocation2 + $0xb8] sm:$0xff]
  %v499 = vld [vmem:[#allocation2 + $0xc0] sm:$0xff]
  %v500 = vld [vmem:[#allocation2 + $0xc8] sm:$0xff]
  %v501 = vld [vmem:[#allocation2 + $0xd0] sm:$0xff]
  %v502 = vld [vmem:[#allocation2 + $0xd8] sm:$0xff]
  %v503 = vld [vmem:[#allocation2 + $0xe0] sm:$0xff]
  %v504 = vld [vmem:[#allocation2 + $0xe8] sm:$0xff]
  %v505 = vld [vmem:[#allocation2 + $0xf0] sm:$0xff]
  %v506 = vld [vmem:[#allocation2 + $0xf8] sm:$0xff]
  %v507 = vpack.c.bf16 %v477, %v475
  %v508 = vpack.c.bf16 %v478, %v476
  %v509 = vpack.c.bf16 %v481, %v479
  %v510 = vpack.c.bf16 %v482, %v480
  %v511 = vpack.c.bf16 %v485, %v483
  %v512 = vpack.c.bf16 %v486, %v484
  %v513 = vpack.c.bf16 %v489, %v487
  %v514 = vpack.c.bf16 %v490, %v488
  %v515 = vpack.c.bf16 %v493, %v491
  %v516 = vpack.c.bf16 %v494, %v492
  %v517 = vpack.c.bf16 %v497, %v495
  %v518 = vpack.c.bf16 %v498, %v496
  %v519 = vpack.c.bf16 %v501, %v499
  %v520 = vpack.c.bf16 %v502, %v500
  %v521 = vpack.c.bf16 %v505, %v503
  %v522 = vpack.c.bf16 %v506, %v504
  %v523 = vld [vmem:[%s3] sm:$0xf]
  %v524 = vld [vmem:[%s3 + $0x4] sm:$0xf]
  %v525 = vld [vmem:[%s3 + $0x8] sm:$0xf]
  %v526 = vld [vmem:[%s3 + $0xc] sm:$0xf]
  %v527 = vld [vmem:[%s3 + $0x10] sm:$0xf]
  %v528 = vld [vmem:[%s3 + $0x14] sm:$0xf]
  %v529 = vld [vmem:[%s3 + $0x18] sm:$0xf]
  %v530 = vld [vmem:[%s3 + $0x1c] sm:$0xf]
  %v531 = vld [vmem:[%s3 + $0x20] sm:$0xf]
  %v532 = vld [vmem:[%s3 + $0x24] sm:$0xf]
  %v533 = vld [vmem:[%s3 + $0x28] sm:$0xf]
  %v534 = vld [vmem:[%s3 + $0x2c] sm:$0xf]
  %v535 = vld [vmem:[%s3 + $0x30] sm:$0xf]
  %v536 = vld [vmem:[%s3 + $0x34] sm:$0xf]
  %v537 = vld [vmem:[%s3 + $0x38] sm:$0xf]
  %v538 = vld [vmem:[%s3 + $0x3c] sm:$0xf]
  %v539 = vld [vmem:[%s3 + $0x40] sm:$0xf]
  %v540 = vld [vmem:[%s3 + $0x44] sm:$0xf]
  %v541 = vld [vmem:[%s3 + $0x48] sm:$0xf]
  %v542 = vld [vmem:[%s3 + $0x4c] sm:$0xf]
  %v543 = vld [vmem:[%s3 + $0x50] sm:$0xf]
  %v544 = vld [vmem:[%s3 + $0x54] sm:$0xf]
  %v545 = vld [vmem:[%s3 + $0x58] sm:$0xf]
  %v546 = vld [vmem:[%s3 + $0x5c] sm:$0xf]
  %v547 = vld [vmem:[%s3 + $0x60] sm:$0xf]
  %v548 = vld [vmem:[%s3 + $0x64] sm:$0xf]
  %v549 = vld [vmem:[%s3 + $0x68] sm:$0xf]
  %v550 = vld [vmem:[%s3 + $0x6c] sm:$0xf]
  %v551 = vld [vmem:[%s3 + $0x70] sm:$0xf]
  %v552 = vld [vmem:[%s3 + $0x74] sm:$0xf]
  %v553 = vld [vmem:[%s3 + $0x78] sm:$0xf]
  %v554 = vld [vmem:[%s3 + $0x7c] sm:$0xf]
  %v555 = vld [vmem:[%s4] sm:$0x1]
  %v557 = vlaneseq
  %v558 = vshrl.u32 %v557, 7
  %v559 = vsub.s32 0, %v558
  %v560 = vrot.slane %v555, %v559
  %v594 = vunpack.c.l.b16 %v523
  %v595 = vunpack.c.l.b16 %v524
  %v596 = vunpack.c.l.b16 %v525
  %v597 = vunpack.c.l.b16 %v526
  %v598 = vunpack.c.l.b16 %v527
  %v599 = vunpack.c.l.b16 %v528
  %v600 = vunpack.c.l.b16 %v529
  %v601 = vunpack.c.l.b16 %v530
  %v602 = vunpack.c.l.b16 %v531
  %v603 = vunpack.c.l.b16 %v532
  %v604 = vunpack.c.l.b16 %v533
  %v605 = vunpack.c.l.b16 %v534
  %v606 = vunpack.c.l.b16 %v535
  %v607 = vunpack.c.l.b16 %v536
  %v608 = vunpack.c.l.b16 %v537
  %v609 = vunpack.c.l.b16 %v538
  %v610 = vunpack.c.l.b16 %v539
  %v611 = vunpack.c.l.b16 %v540
  %v612 = vunpack.c.l.b16 %v541
  %v613 = vunpack.c.l.b16 %v542
  %v614 = vunpack.c.l.b16 %v543
  %v615 = vunpack.c.l.b16 %v544
  %v616 = vunpack.c.l.b16 %v545
  %v617 = vunpack.c.l.b16 %v546
  %v618 = vunpack.c.l.b16 %v547
  %v619 = vunpack.c.l.b16 %v548
  %v620 = vunpack.c.l.b16 %v549
  %v621 = vunpack.c.l.b16 %v550
  %v622 = vunpack.c.l.b16 %v551
  %v623 = vunpack.c.l.b16 %v552
  %v624 = vunpack.c.l.b16 %v553
  %v625 = vunpack.c.l.b16 %v554
  %v626 = vpack.c.b16 %v595, %v594
  %v627 = vpack.c.b16 %v597, %v596
  %v628 = vpack.c.b16 %v599, %v598
  %v629 = vpack.c.b16 %v601, %v600
  %v630 = vpack.c.b16 %v603, %v602
  %v631 = vpack.c.b16 %v605, %v604
  %v632 = vpack.c.b16 %v607, %v606
  %v633 = vpack.c.b16 %v609, %v608
  %v634 = vpack.c.b16 %v611, %v610
  %v635 = vpack.c.b16 %v613, %v612
  %v636 = vpack.c.b16 %v615, %v614
  %v637 = vpack.c.b16 %v617, %v616
  %v638 = vpack.c.b16 %v619, %v618
  %v639 = vpack.c.b16 %v621, %v620
  %v640 = vpack.c.b16 %v623, %v622
  %v641 = vpack.c.b16 %v625, %v624
  %658 = vmatprep.subr.bf16.mxu0 0
  %659 = vmatpush1.bf16.msra.mxu0 %v626
  %660 = vmatprep.subr.bf16.mxu0 0
  %661 = vmatpush1.bf16.msra.mxu0 %v627
  %662 = vmatprep.subr.bf16.mxu0 0
  %663 = vmatpush1.bf16.msra.mxu0 %v628
  %664 = vmatprep.subr.bf16.mxu0 0
  %665 = vmatpush1.bf16.msra.mxu0 %v629
  %666 = vmatprep.subr.bf16.mxu0 0
  %667 = vmatpush1.bf16.msra.mxu0 %v630
  %668 = vmatprep.subr.bf16.mxu0 0
  %669 = vmatpush1.bf16.msra.mxu0 %v631
  %670 = vmatprep.subr.bf16.mxu0 0
  %671 = vmatpush1.bf16.msra.mxu0 %v632
  %672 = vmatprep.subr.bf16.mxu0 0
  %673 = vmatpush1.bf16.msra.mxu0 %v633
  %674 = vmatprep.subr.bf16.mxu0 0
  %675 = vmatpush1.bf16.msra.mxu0 %v634
  %676 = vmatprep.subr.bf16.mxu0 0
  %677 = vmatpush1.bf16.msra.mxu0 %v635
  %678 = vmatprep.subr.bf16.mxu0 0
  %679 = vmatpush1.bf16.msra.mxu0 %v636
  %680 = vmatprep.subr.bf16.mxu0 0
  %681 = vmatpush1.bf16.msra.mxu0 %v637
  %682 = vmatprep.subr.bf16.mxu0 0
  %683 = vmatpush1.bf16.msra.mxu0 %v638
  %684 = vmatprep.subr.bf16.mxu0 0
  %685 = vmatpush1.bf16.msra.mxu0 %v639
  %686 = vmatprep.subr.bf16.mxu0 0
  %687 = vmatpush1.bf16.msra.mxu0 %v640
  %688 = vmatprep.subr.bf16.mxu0 0
  %689 = vmatpush1.bf16.msra.mxu0 %v641
  %690 = vmatprep.mubr.bf16.mxu0 %v508
  %691 = vmatmul.mubr.bf16.gmra.mrb[0].mxu0 %v507
  %v692 = vpop.f32.mrb[0].mxu0
  %v693 = vadd.f32 %v560, %v692
  %v694 = vpop.f32.mrb[0].mxu0
  %v695 = vpop.f32.mrb[0].mxu0
  %v696 = vadd.f32 %v560, %v695
  %v697 = vpop.f32.mrb[0].mxu0
  %698 = vmatprep.mubr.bf16.mxu0 %v510
  %699 = vmatmul.mubr.bf16.gmra.mrb[0].mxu0 %v509
  %v700 = vpop.f32.mrb[0].mxu0
  %v701 = vadd.f32 %v560, %v700
  %v702 = vpop.f32.mrb[0].mxu0
  %v703 = vpop.f32.mrb[0].mxu0
  %v704 = vadd.f32 %v560, %v703
  %v705 = vpop.f32.mrb[0].mxu0
  %706 = vmatprep.mubr.bf16.mxu0 %v512
  %707 = vmatmul.mubr.bf16.gmra.mrb[0].mxu0 %v511
  %v708 = vpop.f32.mrb[0].mxu0
  %v709 = vadd.f32 %v560, %v708
  %v710 = vpop.f32.mrb[0].mxu0
  %v711 = vpop.f32.mrb[0].mxu0
  %v712 = vadd.f32 %v560, %v711
  %v713 = vpop.f32.mrb[0].mxu0
  %714 = vmatprep.mubr.bf16.mxu0 %v514
  %715 = vmatmul.mubr.bf16.gmra.mrb[0].mxu0 %v513
  %v716 = vpop.f32.mrb[0].mxu0
  %v717 = vadd.f32 %v560, %v716
  %v718 = vpop.f32.mrb[0].mxu0
  %v719 = vpop.f32.mrb[0].mxu0
  %v720 = vadd.f32 %v560, %v719
  %v721 = vpop.f32.mrb[0].mxu0
  %722 = vmatprep.mubr.bf16.mxu0 %v516
  %723 = vmatmul.mubr.bf16.gmra.mrb[0].mxu0 %v515
  %v724 = vpop.f32.mrb[0].mxu0
  %v725 = vadd.f32 %v560, %v724
  %v726 = vpop.f32.mrb[0].mxu0
  %v727 = vpop.f32.mrb[0].mxu0
  %v728 = vadd.f32 %v560, %v727
  %v729 = vpop.f32.mrb[0].mxu0
  %730 = vmatprep.mubr.bf16.mxu0 %v518
  %731 = vmatmul.mubr.bf16.gmra.mrb[0].mxu0 %v517
  %v732 = vpop.f32.mrb[0].mxu0
  %v733 = vadd.f32 %v560, %v732
  %v734 = vpop.f32.mrb[0].mxu0
  %v735 = vpop.f32.mrb[0].mxu0
  %v736 = vadd.f32 %v560, %v735
  %v737 = vpop.f32.mrb[0].mxu0
  %738 = vmatprep.mubr.bf16.mxu0 %v520
  %739 = vmatmul.mubr.bf16.gmra.mrb[0].mxu0 %v519
  %v740 = vpop.f32.mrb[0].mxu0
  %v741 = vadd.f32 %v560, %v740
  %v742 = vpop.f32.mrb[0].mxu0
  %v743 = vpop.f32.mrb[0].mxu0
  %v744 = vadd.f32 %v560, %v743
  %v745 = vpop.f32.mrb[0].mxu0
  %746 = vmatprep.mubr.bf16.mxu0 %v522
  %747 = vmatmul.mubr.bf16.gmra.mrb[0].mxu0 %v521
  %v748 = vpop.f32.mrb[0].mxu0
  %v749 = vadd.f32 %v560, %v748
  %v750 = vpop.f32.mrb[0].mxu0
  %v751 = vpop.f32.mrb[0].mxu0
  %v752 = vadd.f32 %v560, %v751
  %v753 = vpop.f32.mrb[0].mxu0
  %754 = vdwg.mxu0
  %v755 = vmax.f32 %v693, 0.0
  %v756 = vmax.f32 %v696, 0.0
  %v757 = vmax.f32 %v701, 0.0
  %v758 = vmax.f32 %v704, 0.0
  %v759 = vmax.f32 %v709, 0.0
  %v760 = vmax.f32 %v712, 0.0
  %v761 = vmax.f32 %v717, 0.0
  %v762 = vmax.f32 %v720, 0.0
  %v763 = vmax.f32 %v725, 0.0
  %v764 = vmax.f32 %v728, 0.0
  %v765 = vmax.f32 %v733, 0.0
  %v766 = vmax.f32 %v736, 0.0
  %v767 = vmax.f32 %v741, 0.0
  %v768 = vmax.f32 %v744, 0.0
  %v769 = vmax.f32 %v749, 0.0
  %v770 = vmax.f32 %v752, 0.0
  %771 = vst [vmem:[%s6] sm:$0xff] %v755
  %772 = vst [vmem:[%s6 + $0x8] sm:$0xff] %v756
  %773 = vst [vmem:[%s6 + $0x10] sm:$0xff] %v757
  %774 = vst [vmem:[%s6 + $0x18] sm:$0xff] %v758
  %775 = vst [vmem:[%s6 + $0x20] sm:$0xff] %v759
  %776 = vst [vmem:[%s6 + $0x28] sm:$0xff] %v760
  %777 = vst [vmem:[%s6 + $0x30] sm:$0xff] %v761
  %778 = vst [vmem:[%s6 + $0x38] sm:$0xff] %v762
  %779 = vst [vmem:[%s6 + $0x40] sm:$0xff] %v763
  %780 = vst [vmem:[%s6 + $0x48] sm:$0xff] %v764
  %781 = vst [vmem:[%s6 + $0x50] sm:$0xff] %v765
  %782 = vst [vmem:[%s6 + $0x58] sm:$0xff] %v766
  %783 = vst [vmem:[%s6 + $0x60] sm:$0xff] %v767
  %784 = vst [vmem:[%s6 + $0x68] sm:$0xff] %v768
  %785 = vst [vmem:[%s6 + $0x70] sm:$0xff] %v769
  %786 = vst [vmem:[%s6 + $0x78] sm:$0xff] %v770
  // Predicated region
  $region26: #{lru_forward.1} parent=0 // pred_check
    _
  $region27: #{lru_forward.1} parent=0 // pred_check_branch
    %788 = sbr.rel (0) target = $region29
  $region28: #{lru_forward.1} parent=0 // pred_region
    _
  $region29: #{lru_forward.1} parent=0 // pred_fallthru
    _
  // Predicated region
  $region30: #{lru_forward.1} parent=0 // pred_check
    _
  $region31: #{lru_forward.1} parent=0 // pred_check_branch
    %790 = sbr.rel (0) target = $region33
  $region32: #{lru_forward.1} parent=0 // pred_region
    _
  $region33: #{lru_forward.1} parent=0 // pred_fallthru
    _

</llo_original>
